<compile_context>
chip_gen: v7x
topology: tpu7x:2x2x1
jax: 0.10.0
libtpu: 0.0.40
codegen_flags: <defaults>
</compile_context>

<pallas_src>
import functools

import jax
import jax.numpy as jnp
from jax.experimental import pallas as pl
from jax.experimental.pallas import tpu as pltpu


def _round_up(a, b):
    return (a + b - 1) // b * b


def _vmem_budget():
    """Return (target block bytes, scoped-VMEM limit), generation aware."""
    cap = None
    try:
        cap = getattr(pltpu.get_tpu_info(), "vmem_capacity_bytes", None)
    except Exception:
        cap = None
    if cap is None:
        cap = 64 * 1024 * 1024                       # assume tightest (v7x)
    if cap >= 100 * 1024 * 1024:                     # v5e / v6e: 128 MiB VMEM
        return 4 * 1024 * 1024, 64 * 1024 * 1024
    return 2 * 1024 * 1024, 40 * 1024 * 1024         # v7x: 64 MiB VMEM


def _pick_tiles(nc, hw, itemsize, block_bytes):
    """Pick (row_tile, hw_tile, n_row_blocks, n_hw_blocks) near block_bytes."""
    hw_pad = _round_up(hw, 128)
    # Fill lanes first (streaming / unmasked vst), at least 512 of them.
    lanes = _round_up(max(512, block_bytes // (8 * itemsize)), 128)
    if lanes >= hw_pad:
        tile_hw, n_hw = hw, 1                        # whole row, one exact tile
    else:
        tile_hw = lanes
        n_hw = (hw + tile_hw - 1) // tile_hw
    # Then grow rows (multiples of 8 sublanes) toward the byte target.
    rows = max(8, (block_bytes // (tile_hw * itemsize)) // 8 * 8)
    r_t = nc if rows >= nc else rows
    n_rows = (nc + r_t - 1) // r_t
    return r_t, tile_hw, n_rows, n_hw


# ---------------------------------------------------------------------------
# Pass 1: per-row (i.e. per-(N,C)) mean / UNBIASED variance over HW.
# ---------------------------------------------------------------------------
def _stats_kernel(x_ref, mean_ref, var_ref, *scratch,
                  hw, tile_hw, n_hw, ragged):
    inv_n = 1.0 / float(hw)
    # torch.Tensor.var default is unbiased (divide by HW-1).
    # TODO(synk): HW == 1 gives NaN/inf in PyTorch; here we guard with max(.,1).
    inv_nm1 = 1.0 / float(max(hw - 1, 1))
    x = x_ref[...].astype(jnp.float32)               # (R, T)

    if n_hw == 1:
        # Whole row resident in VMEM: numerically-stable two-pass mean / M2.
        s = jnp.sum(x, axis=-1, keepdims=True)
        mean = s * inv_n
        d = x - mean
        m2 = jnp.sum(d * d, axis=-1, keepdims=True)
        mean_ref[...] = mean
        var_ref[...] = m2 * inv_nm1
        return

    sum_ref, sq_ref = scratch
    h = pl.program_id(1)
    last = n_hw - 1

    @pl.when(h == 0)
    def _():
        sum_ref[...] = jnp.zeros_like(sum_ref)
        sq_ref[...] = jnp.zeros_like(sq_ref)

    def _accum(xv):                                   # pure VALU per tile
        sum_ref[...] += xv
        sq_ref[...] += xv * xv

    if ragged:
        # Only the final hw tile can be ragged; all earlier tiles are full,
        # so only that tile pays for the iota / compare / select.
        @pl.when(h < last)
        def _():
            _accum(x)

        @pl.when(h == last)
        def _():
            lane = jax.lax.broadcasted_iota(jnp.int32, x.shape, 1)
            valid = lane < (hw - h * tile_hw)
            _accum(jnp.where(valid, x, 0.0))
    else:
        _accum(x)

    @pl.when(h == last)
    def _():
        s = jnp.sum(sum_ref[...], axis=-1, keepdims=True)   # one XLU reduce
        sq = jnp.sum(sq_ref[...], axis=-1, keepdims=True)   # per row block
        mean = s * inv_n
        # TODO(synk): E[x^2] - mean^2 is less stable than a Welford combine for
        # huge HW with a large DC offset; fine in f32 for activation-scale data.
        m2 = sq - s * mean
        mean_ref[...] = mean
        var_ref[...] = m2 * inv_nm1


# ---------------------------------------------------------------------------
# Pass 2: out = x * scale + shift   (scale/shift are per-row, f32 math).
# ---------------------------------------------------------------------------
def _normalize_kernel(x_ref, scale_ref, shift_ref, o_ref):
    x = x_ref[...].astype(jnp.float32)
    o_ref[...] = (x * scale_ref[...] + shift_ref[...]).astype(o_ref.dtype)


def switch_norm_2d(x, weight, bias, mean_weight, var_weight,
                   running_mean, running_var,
                   eps=1e-5, momentum=0.997, using_moving_average=True,
                   block_bytes=None):
    """Training-mode SwitchNorm2d forward.

    x:            (N, C, H, W)
    weight, bias: (1, C, 1, 1)
    mean_weight, var_weight: (3,)
    running_mean, running_var: (1, C, 1)   (updated values are returned)
    """
    N, C, H, W = x.shape
    NC, HW = N * C, H * W
    itemsize = jnp.dtype(x.dtype).itemsize

    target_bytes, vmem_limit = _vmem_budget()
    if block_bytes is None:
        block_bytes = target_bytes

    r_t, tile_hw, n_rows, n_hw = _pick_tiles(NC, HW, itemsize, block_bytes)
    ragged = (n_hw > 1) and (HW % tile_hw != 0)

    x2 = x.reshape(NC, HW)

    stats_scratch = []
    if n_hw > 1:
        stats_scratch = [pltpu.VMEM((r_t, tile_hw), jnp.float32),
                         pltpu.VMEM((r_t, tile_hw), jnp.float32)]

    # ---- pass 1: per-row mean / unbiased variance ---------------------------
    mean_in2, var_in2 = pl.pallas_call(
        functools.partial(_stats_kernel, hw=HW, tile_hw=tile_hw,
                          n_hw=n_hw, ragged=ragged),
        grid=(n_rows, n_hw),
        in_specs=[pl.BlockSpec((r_t, tile_hw), lambda r, h: (r, h))],
        out_specs=(pl.BlockSpec((r_t, 1), lambda r, h: (r, 0)),
                   pl.BlockSpec((r_t, 1), lambda r, h: (r, 0))),
        out_shape=(jax.ShapeDtypeStruct((NC, 1), jnp.float32),
                   jax.ShapeDtypeStruct((NC, 1), jnp.float32)),
        scratch_shapes=stats_scratch,
        compiler_params=pltpu.CompilerParams(
            dimension_semantics=("parallel", "arbitrary"),
            vmem_limit_bytes=vmem_limit),
        cost_estimate=pl.CostEstimate(
            flops=3 * NC * HW, transcendentals=0,
            bytes_accessed=NC * HW * itemsize + 8 * NC),
    )(x2)

    # ---- glue: tiny O(N*C) LN/BN stats, softmax mixing, fused affine --------
    mean_in = mean_in2.reshape(N, C, 1)
    var_in = var_in2.reshape(N, C, 1)
    mean_ln = jnp.mean(mean_in, axis=1, keepdims=True)          # (N, 1, 1)
    temp = var_in + mean_in * mean_in
    var_ln = jnp.mean(temp, axis=1, keepdims=True) - mean_ln * mean_ln
    mean_bn = jnp.mean(mean_in, axis=0, keepdims=True)          # (1, C, 1)
    var_bn = jnp.mean(temp, axis=0, keepdims=True) - mean_bn * mean_bn

    mw = jax.nn.softmax(mean_weight.astype(jnp.float32), axis=0)
    vw = jax.nn.softmax(var_weight.astype(jnp.float32), axis=0)

    mean = mw[0] * mean_in + mw[1] * mean_ln + mw[2] * mean_bn  # (N, C, 1)
    var = vw[0] * var_in + vw[1] * var_ln + vw[2] * var_bn      # (N, C, 1)

    inv = jax.lax.rsqrt(var + eps)                              # tiny tensor
    w3 = weight.reshape(1, C, 1).astype(jnp.float32)
    b3 = bias.reshape(1, C, 1).astype(jnp.float32)
    scale3 = w3 * inv                                           # (N, C, 1)
    shift3 = b3 - mean * scale3                                 # (N, C, 1)
    scale = scale3.reshape(NC, 1)
    shift = shift3.reshape(NC, 1)

    # ---- pass 2: normalize (fully parallel, lane-dense streaming tiles) -----
    out2 = pl.pallas_call(
        _normalize_kernel,
        grid=(n_rows, n_hw),
        in_specs=[pl.BlockSpec((r_t, tile_hw), lambda r, h: (r, h)),
                  pl.BlockSpec((r_t, 1), lambda r, h: (r, 0)),
                  pl.BlockSpec((r_t, 1), lambda r, h: (r, 0))],
        out_specs=pl.BlockSpec((r_t, tile_hw), lambda r, h: (r, h)),
        out_shape=jax.ShapeDtypeStruct((NC, HW), x.dtype),
        compiler_params=pltpu.CompilerParams(
            dimension_semantics=("parallel", "parallel"),
            vmem_limit_bytes=vmem_limit),
        cost_estimate=pl.CostEstimate(
            flops=2 * NC * HW, transcendentals=0,
            bytes_accessed=2 * NC * HW * itemsize + 8 * NC),
    )(x2, scale, shift)

    # ---- running-stat update (PyTorch training branch) ----------------------
    if using_moving_average:
        new_running_mean = running_mean * momentum + (1.0 - momentum) * mean_bn
        new_running_var = running_var * momentum + (1.0 - momentum) * var_bn
    else:
        new_running_mean = running_mean + mean_bn
        new_running_var = running_var + (mean_bn ** 2 + var_bn)

    return out2.reshape(N, C, H, W), new_running_mean, new_running_var


def _reference(x, weight, bias, mean_weight, var_weight, eps=1e-5):
    # pure-JAX reference of the training-mode forward (sanity check)
    N, C, H, W = x.shape
    xf = x.reshape(N, C, -1).astype(jnp.float32)
    hw = xf.shape[-1]
    mean_in = jnp.mean(xf, -1, keepdims=True)
    var_in = jnp.var(xf, -1, keepdims=True) * (hw / (hw - 1))
    mean_ln = jnp.mean(mean_in, 1, keepdims=True)
    temp = var_in + mean_in ** 2
    var_ln = jnp.mean(temp, 1, keepdims=True) - mean_ln ** 2
    mean_bn = jnp.mean(mean_in, 0, keepdims=True)
    var_bn = jnp.mean(temp, 0, keepdims=True) - mean_bn ** 2
    mw = jax.nn.softmax(mean_weight, 0)
    vw = jax.nn.softmax(var_weight, 0)
    mean = mw[0] * mean_in + mw[1] * mean_ln + mw[2] * mean_bn
    var = vw[0] * var_in + vw[1] * var_ln + vw[2] * var_bn
    xn = (xf - mean) / jnp.sqrt(var + eps)
    return xn.reshape(N, C, H, W) * weight + bias


def _run_case(key, N, C, H, W, block_bytes=None):
    x = jax.random.normal(key, (N, C, H, W), dtype=jnp.float32)
    weight = jnp.ones((1, C, 1, 1), jnp.float32)
    bias = jnp.zeros((1, C, 1, 1), jnp.float32)
    mean_weight = jnp.ones((3,), jnp.float32)
    var_weight = jnp.ones((3,), jnp.float32)
    running_mean = jnp.zeros((1, C, 1), jnp.float32)
    running_var = jnp.zeros((1, C, 1), jnp.float32)

    out, rm, rv = switch_norm_2d(x, weight, bias, mean_weight, var_weight,
                                 running_mean, running_var,
                                 block_bytes=block_bytes)
    out = jax.block_until_ready(out)
    jax.block_until_ready(rm)
    jax.block_until_ready(rv)

    ref = _reference(x, weight, bias, mean_weight, var_weight)
    assert out.shape == (N, C, H, W)
    err = float(jnp.max(jnp.abs(out - ref)))
    assert err < 1e-4, f"mismatch vs pure-JAX reference ({N},{C},{H},{W}): {err}"


if __name__ == "__main__":
    key = jax.random.PRNGKey(0)
    keys = jax.random.split(key, 4)
    # primary small case: single hw tile, single row block
    _run_case(keys[0], 2, 4, 16, 16)
    # forced-small blocks: multi hw-tile per-lane accumulator path (tile 512)
    _run_case(keys[1], 2, 4, 32, 32, block_bytes=8 * 512 * 4)
    # ragged last hw tile (HW = 900, tile 512)
    _run_case(keys[2], 2, 4, 30, 30, block_bytes=8 * 512 * 4)
    # ragged last row block (NC = 12, row tile 8)
    _run_case(keys[3], 3, 4, 16, 16, block_bytes=8 * 256 * 4)
    print("KERNEL_OK")
</pallas_src>

<mosaic_0001>
module attributes {stable_mosaic.version = 11 : i64} {
  func.func @_stats_kernel(%arg0: i32, %arg1: i32, %arg2: memref<8x256xf32, #tpu.memory_space<vmem>>, %arg3: memref<8x1xf32, #tpu.memory_space<vmem>>, %arg4: memref<8x1xf32, #tpu.memory_space<vmem>>) attributes {dimension_semantics = [#tpu.dimension_semantics<parallel>, #tpu.dimension_semantics<arbitrary>], iteration_bounds = array<i64: 1, 1>, scalar_prefetch = 0 : i64, scratch_operands = 0 : i64, tpu.core_type = #tpu.core_type<tc>, window_params = [{transform_indices = @transform_0, window_bounds = array<i64: 8, 256>}, {transform_indices = @transform_1, window_bounds = array<i64: 8, 1>}, {transform_indices = @transform_2, window_bounds = array<i64: 8, 1>}]} {
    %c0 = arith.constant 0 : index
    %c0_0 = arith.constant 0 : index
    %0 = vector.load %arg2[%c0, %c0_0] : memref<8x256xf32, #tpu.memory_space<vmem>>, vector<8x256xf32>
    %cst = arith.constant dense<0.000000e+00> : vector<8xf32>
    %1 = vector.multi_reduction <add>, %0, %cst [1] : vector<8x256xf32> to vector<8xf32>
    %2 = vector.shape_cast %1 : vector<8xf32> to vector<8x1xf32>
    %cst_1 = arith.constant 3.906250e-03 : f32
    %3 = vector.broadcast %cst_1 : f32 to vector<8x1xf32>
    %4 = arith.mulf %2, %3 : vector<8x1xf32>
    %5 = vector.broadcast %4 : vector<8x1xf32> to vector<8x256xf32>
    %6 = arith.subf %0, %5 : vector<8x256xf32>
    %7 = arith.mulf %6, %6 : vector<8x256xf32>
    %cst_2 = arith.constant dense<0.000000e+00> : vector<8xf32>
    %8 = vector.multi_reduction <add>, %7, %cst_2 [1] : vector<8x256xf32> to vector<8xf32>
    %9 = vector.shape_cast %8 : vector<8xf32> to vector<8x1xf32>
    %c0_3 = arith.constant 0 : index
    %c0_4 = arith.constant 0 : index
    %10 = vector.load %arg3[%c0_3, %c0_4] : memref<8x1xf32, #tpu.memory_space<vmem>>, vector<8x1xf32>
    tpu.vector_store %arg3[%c0_3, %c0_4], %4 {strides = array<i32>} : memref<8x1xf32, #tpu.memory_space<vmem>>, vector<8x1xf32>,
    %cst_5 = arith.constant 0.00392156886 : f32
    %11 = vector.broadcast %cst_5 : f32 to vector<8x1xf32>
    %12 = arith.mulf %9, %11 : vector<8x1xf32>
    %c0_6 = arith.constant 0 : index
    %c0_7 = arith.constant 0 : index
    %13 = vector.load %arg4[%c0_6, %c0_7] : memref<8x1xf32, #tpu.memory_space<vmem>>, vector<8x1xf32>
    tpu.vector_store %arg4[%c0_6, %c0_7], %12 {strides = array<i32>} : memref<8x1xf32, #tpu.memory_space<vmem>>, vector<8x1xf32>,
    return
  }
  func.func @transform_0(%arg0: i32, %arg1: i32) -> (i32, i32) {
    %c0_i32 = arith.constant 0 : i32
    return %arg0, %arg1 : i32, i32
  }
  func.func @transform_1(%arg0: i32, %arg1: i32) -> (i32, i32) {
    %c0_i32 = arith.constant 0 : i32
    %c0_i32_0 = arith.constant 0 : i32
    return %arg0, %c0_i32 : i32, i32
  }
  func.func @transform_2(%arg0: i32, %arg1: i32) -> (i32, i32) {
    %c0_i32 = arith.constant 0 : i32
    %c0_i32_0 = arith.constant 0 : i32
    return %arg0, %c0_i32 : i32, i32
  }
}

</mosaic_0001>

<llo_original>
// kernel: tpu_custom_call.1
$region0: #{tpu_custom_call.1}
  #allocation0 [shape = 'u32[]', space=smem, size = 0x4, offset = 0x4, fixed_abs, tag = 'smem constant byte address 0x4 - core index']
  #allocation1 [shape = 'u32[144,128]{1,0:T(1,128)}', space=vmem, size = 0x12000, scoped, tag = 'internal scratch']
  %s0 = inlined_call_operand.hbm [shape: f32[8,256], index: 0, kind: input, shape index: {}]
  %s1 = inlined_call_operand.vmem [shape: f32[8,1], index: 1, kind: output, shape index: {0}]
  %s2 = inlined_call_operand.vmem [shape: f32[8,1], index: 2, kind: output, shape index: {1}]
  %3 = xla_tuple %s1, %s2
  %s4 = sld [smem:[#allocation0]]
  $region26: #{tpu_custom_call.1} parent=0
    _
  %s6 = ssub.s32 1, %s4
  %s7 = scalar_select 0, %s6, %s4
  $region1: #{tpu_custom_call.1} parent=0
    #allocation2 [shape = 'u8[8192]{0}', space=vmem, size = 0x2000, scoped, tag = 'input window, operand 0, single buffered']
    #allocation3 [shape = 's32[1]{0}', space=sflag, size = 0x4, scoped, tag = 'scoped memory for tpu_custom_call.1']
    %8 = vsyncpa [#allocation3], 0
    // Predicated region
    $region2: #{tpu_custom_call.1} parent=1 // pred_check
      _
    $region3: #{tpu_custom_call.1} parent=1 // pred_check_branch
      %10 = sbr.rel (0) target = $region5
    $region4: #{tpu_custom_call.1} parent=1 // pred_region
      %s12 = ssub.s32 256, 256
      %13 = vsyncadd [#allocation3], %s12
      %s15 = sshll.u32 [#allocation2], 4
      %s16 = int_to_ptr.vmem [resolvable:$true] %s15
      %18 = dma.hbm_to_vmem [thread:$0]  %s0, 256, %s16, [#allocation3]
    $region5: #{tpu_custom_call.1} parent=1 // pred_fallthru
      _
    // Predicated region
    $region6: #{tpu_custom_call.1} parent=1 // pred_check
      _
    $region7: #{tpu_custom_call.1} parent=1 // pred_check_branch
      %20 = sbr.rel (0) target = $region9
    $region8: #{tpu_custom_call.1} parent=1 // pred_region
      %21 = dma.done [#allocation3], 256
    $region9: #{tpu_custom_call.1} parent=1 // pred_fallthru
      _
    %v22 = vld [vmem:[#allocation2] sm:$0xff]
    %v23 = vld [vmem:[#allocation2 + $0x8] sm:$0xff]
    %v24 = vadd.f32 %v22, %v23
    %25 = vadd.xlane.f32.xlu0 %v24
    %v26 = vpop.xlane.xlu0 %25
    %v27 = vmul.f32 %v26, 0.00390625
    %v28 = vsub.f32 %v22, %v27
    %v29 = vsub.f32 %v23, %v27
    %v30 = vmul.f32 %v28, %v28
    %v31 = vmul.f32 %v29, %v29
    %v32 = vadd.f32 %v30, %v31
    %33 = vadd.xlane.f32.xlu0 %v32
    %v34 = vpop.xlane.xlu0 %33
    %vm35 = vcmask 7168
    %36 = vst.msk [vmem:[%s1] sm:$0xff] %vm35, %v27
    %v37 = vmul.f32 %v34, 0.003921569
    %38 = vst.msk [vmem:[%s2] sm:$0xff] %vm35, %v37
    // Predicated region
    $region10: #{tpu_custom_call.1} parent=1 // pred_check
      _
    $region11: #{tpu_custom_call.1} parent=1 // pred_check_branch
      %40 = sbr.rel (0) target = $region13
    $region12: #{tpu_custom_call.1} parent=1 // pred_region
      _
    $region13: #{tpu_custom_call.1} parent=1 // pred_fallthru
      _
    // Predicated region
    $region14: #{tpu_custom_call.1} parent=1 // pred_check
      _
    $region15: #{tpu_custom_call.1} parent=1 // pred_check_branch
      %42 = sbr.rel (0) target = $region17
    $region16: #{tpu_custom_call.1} parent=1 // pred_region
      _
    $region17: #{tpu_custom_call.1} parent=1 // pred_fallthru
      _
    // Predicated region
    $region18: #{tpu_custom_call.1} parent=1 // pred_check
      _
    $region19: #{tpu_custom_call.1} parent=1 // pred_check_branch
      %44 = sbr.rel (0) target = $region21
    $region20: #{tpu_custom_call.1} parent=1 // pred_region
      _
    $region21: #{tpu_custom_call.1} parent=1 // pred_fallthru
      _
    // Predicated region
    $region22: #{tpu_custom_call.1} parent=1 // pred_check
      _
    $region23: #{tpu_custom_call.1} parent=1 // pred_check_branch
      %46 = sbr.rel (0) target = $region25
    $region24: #{tpu_custom_call.1} parent=1 // pred_region
      _
    $region25: #{tpu_custom_call.1} parent=1 // pred_fallthru
      _
    %47 = vsyncpa [#allocation3], 1

</llo_original>
